<compile_context>
chip_gen: v7x
topology: tpu7x:2x2x1
jax: 0.10.0
libtpu: 0.0.40
codegen_flags: <defaults>
</compile_context>

<pallas_src>
import jax
import jax.numpy as jnp
import numpy as np
from jax.experimental import pallas as pl
from jax.experimental.pallas import tpu as pltpu

N, C, L = 2, 32, 16          # batch, channels, sequence length (PyTorch NCL input)
NL = N * L
RED = 8                      # SE reduction
CR = C // RED
EPS = 1e-5                   # BatchNorm eps (PyTorch default)


def residual_block_kernel(x_ref, w_ref, se_ref, p_ref, out_ref):
    # x_ref: (N, C, L) PyTorch layout.  Build the flat (N*L, C) slab in-kernel with
    # per-batch 2D transposes (cheap XLU vxpose) + sublane concat.
    x = jnp.concatenate([x_ref[n].T for n in range(N)], axis=0)   # (N*L, C)

    P = p_ref[...]                                                # (6, C) packed vecs

    # Halo masks for "same" padding (kernel=3): does flat row l have a valid
    # l-1 / l+1 inside its own sequence?  Also masks the batch boundary.
    lpos = jax.lax.broadcasted_iota(jnp.int32, (NL, C), 0) % L
    has_prev = lpos != 0
    has_next = lpos != (L - 1)

    def conv_bn(h, base, g, be):
        # Conv1d(k=3, pad=1): taps built in registers via sublane rolls, then three
        # accumulated (NL,C)x(C,C) MXU dots (no lane-axis concat -> no XLU lane
        # shuffles competing with MXU pushes).  Conv bias omitted: training-mode BN
        # absorbs it exactly.
        h_prev = jnp.where(has_prev, pltpu.roll(h, 1, axis=0), 0.0)
        h_next = jnp.where(has_next, pltpu.roll(h, NL - 1, axis=0), 0.0)
        y = (jnp.dot(h_prev, w_ref[base + 0], preferred_element_type=jnp.float32)
             + jnp.dot(h, w_ref[base + 1], preferred_element_type=jnp.float32)
             + jnp.dot(h_next, w_ref[base + 2], preferred_element_type=jnp.float32))
        # Training-mode BN (biased variance), two-pass stats, one affine apply.
        mean = jnp.mean(y, axis=0, keepdims=True)                 # (1, C)
        d = y - mean
        var = jnp.mean(d * d, axis=0, keepdims=True)
        return d * (g * jax.lax.rsqrt(var + EPS)) + be

    h = jnp.maximum(conv_bn(x, 0, P[0:1], P[1:2]), 0.0)
    h = conv_bn(h, 3, P[2:3], P[3:4])

    # SEBlock on the VPU: global average pool over L, two dense layers expressed as
    # broadcast-multiply + reductions, sigmoid gate, per-channel scale.
    se = se_ref[...]                                              # (2, CR, C)
    h3 = h.reshape(N, L, C)
    pooled = jnp.mean(h3, axis=1)                                 # (N, C)
    s1 = jnp.maximum(
        jnp.sum(pooled[:, None, :] * se[0][None, :, :], axis=-1)
        + P[4:5, :CR], 0.0)                                       # (N, CR)
    s2 = jax.nn.sigmoid(
        jnp.sum(s1[:, :, None] * se[1][None, :, :], axis=1)
        + P[5:6])                                                 # (N, C)

    out = jnp.maximum(x.reshape(N, L, C) + h3 * s2[:, None, :], 0.0)   # (N, L, C)
    # Store back in PyTorch NCL layout (per-batch transpose on the way out).
    for n in range(N):
        out_ref[n] = out[n].T


def pack_params(p):
    """Pack PyTorch-layout params into the 3 packed kernel operands.

    Conv biases are intentionally NOT packed: under training-mode BatchNorm the
    batch mean absorbs them exactly, so they never reach the kernel.
    """
    # Conv weights (C_out, C_in, 3) -> per-tap (C_in, C_out) matrices, stacked as
    # (2*3, C, C) with row index = conv*3 + k (k=0 -> x[l-1], 1 -> x[l], 2 -> x[l+1]).
    w_taps = jnp.concatenate([
        jnp.transpose(p['w1'], (2, 1, 0)),
        jnp.transpose(p['w2'], (2, 1, 0)),
    ], axis=0)                                                    # (6, C, C)
    # SE dense weights stacked into one operand: fc1 as-is (CR, C), fc2 transposed.
    w_se = jnp.stack([p['sw1'], p['sw2'].T], axis=0)              # (2, CR, C)
    # All row-vector params in one (6, C) slab -> one DMA instead of eight.
    sb1_pad = jnp.zeros((C,), jnp.float32).at[:CR].set(p['sb1'])
    vecs = jnp.stack([p['g1'], p['be1'], p['g2'], p['be2'], sb1_pad, p['sb2']],
                     axis=0)                                      # (6, C)
    return w_taps, w_se, vecs


def residual_block(x_ncl, params):
    w_taps, w_se, vecs = pack_params(params)
    spec = pl.BlockSpec(memory_space=pltpu.MemorySpace.VMEM)
    return pl.pallas_call(
        residual_block_kernel,
        out_shape=jax.ShapeDtypeStruct((N, C, L), jnp.float32),
        in_specs=[spec] * 4,
        out_specs=spec,
    )(x_ncl.astype(jnp.float32), w_taps, w_se, vecs)


def init_params(key):
    """Parameters in PyTorch layouts (Conv1d: (C_out, C_in, K); Linear: (out, in))."""
    ks = jax.random.split(key, 12)
    u = lambda k, shape, bound: jax.random.uniform(k, shape, jnp.float32, -bound, bound)
    nrm = lambda k, shape: jax.random.normal(k, shape, jnp.float32)
    cb = 1.0 / np.sqrt(C * 3)
    w1 = u(ks[0], (C, C, 3), cb)
    b1 = u(ks[1], (C,), cb)
    w2 = u(ks[2], (C, C, 3), cb)
    b2 = u(ks[3], (C,), cb)
    g1 = 1.0 + 0.1 * nrm(ks[4], (C,))
    be1 = 0.1 * nrm(ks[5], (C,))
    g2 = 1.0 + 0.1 * nrm(ks[6], (C,))
    be2 = 0.1 * nrm(ks[7], (C,))
    lb1 = 1.0 / np.sqrt(C)
    sw1 = u(ks[8], (CR, C), lb1)
    sb1 = u(ks[9], (CR,), lb1)
    lb2 = 1.0 / np.sqrt(CR)
    sw2 = u(ks[10], (C, CR), lb2)
    sb2 = u(ks[11], (C,), lb2)
    return dict(w1=w1, b1=b1, w2=w2, b2=b2, g1=g1, be1=be1, g2=g2, be2=be2,
                sw1=sw1, sb1=sb1, sw2=sw2, sb2=sb2)


def reference(x_ncl, p):
    # Pure-JAX reference mirroring PyTorch semantics (NCL layout, conv biases kept:
    # they must be absorbed by training-mode BN, which the kernel relies on).
    dn = ('NCH', 'OIH', 'NCH')

    def conv(h, w, b):
        y = jax.lax.conv_general_dilated(h, w, (1,), ((1, 1),), dimension_numbers=dn)
        return y + b.reshape(1, C, 1)

    def bn(h, g, be):
        mean = jnp.mean(h, axis=(0, 2), keepdims=True)
        var = jnp.mean((h - mean) ** 2, axis=(0, 2), keepdims=True)
        return g.reshape(1, C, 1) * (h - mean) / jnp.sqrt(var + EPS) + be.reshape(1, C, 1)

    h = jnp.maximum(bn(conv(x_ncl, p['w1'], p['b1']), p['g1'], p['be1']), 0.0)
    h = bn(conv(h, p['w2'], p['b2']), p['g2'], p['be2'])
    pooled = jnp.mean(h, axis=2)                                  # (N, C)
    s1 = jnp.maximum(pooled @ p['sw1'].T + p['sb1'], 0.0)
    s2 = jax.nn.sigmoid(s1 @ p['sw2'].T + p['sb2'])
    h = h * s2[:, :, None]
    return jnp.maximum(x_ncl + h, 0.0)


if __name__ == "__main__":
    key = jax.random.PRNGKey(0)
    kx, kp = jax.random.split(key)
    x = jax.random.normal(kx, (N, C, L), jnp.float32)             # PyTorch NCL input
    params = init_params(kp)

    out = residual_block(x, params)
    out = jax.block_until_ready(out)

    ref = reference(x, params)
    np.testing.assert_allclose(np.asarray(out), np.asarray(ref), rtol=1e-4, atol=1e-4)
    print("KERNEL_OK")
</pallas_src>

<mosaic_0001>
module attributes {stable_mosaic.version = 11 : i64} {
  func.func @residual_block_kernel(%arg0: memref<2x32x16xf32, #tpu.memory_space<vmem>>, %arg1: memref<6x32x32xf32, #tpu.memory_space<vmem>>, %arg2: memref<2x4x32xf32, #tpu.memory_space<vmem>>, %arg3: memref<6x32xf32, #tpu.memory_space<vmem>>, %arg4: memref<2x32x16xf32, #tpu.memory_space<vmem>>) attributes {dimension_semantics = [], scalar_prefetch = 0 : i64, scratch_operands = 0 : i64, tpu.core_type = #tpu.core_type<tc>} {
    %c0 = arith.constant 0 : index
    %c0_0 = arith.constant 0 : index
    %c0_1 = arith.constant 0 : index
    %0 = vector.load %arg0[%c0, %c0_0, %c0_1] : memref<2x32x16xf32, #tpu.memory_space<vmem>>, vector<1x32x16xf32>
    %1 = vector.shape_cast %0 : vector<1x32x16xf32> to vector<32x16xf32>
    %2 = tpu.transpose %1, [1, 0] : vector<32x16xf32> -> vector<16x32xf32>
    %c1 = arith.constant 1 : index
    %c0_2 = arith.constant 0 : index
    %c0_3 = arith.constant 0 : index
    %3 = vector.load %arg0[%c1, %c0_2, %c0_3] : memref<2x32x16xf32, #tpu.memory_space<vmem>>, vector<1x32x16xf32>
    %4 = vector.shape_cast %3 : vector<1x32x16xf32> to vector<32x16xf32>
    %5 = tpu.transpose %4, [1, 0] : vector<32x16xf32> -> vector<16x32xf32>
    %6 = tpu.concatenate %2, %5 in 0 : vector<16x32xf32>, vector<16x32xf32> -> vector<32x32xf32>
    %c0_4 = arith.constant 0 : index
    %c0_5 = arith.constant 0 : index
    %7 = vector.load %arg3[%c0_4, %c0_5] : memref<6x32xf32, #tpu.memory_space<vmem>>, vector<6x32xf32>
    %8 = tpu.iota {dimensions = array<i32: 0>} : vector<32x32xi32>
    %c16_i32 = arith.constant 16 : i32
    %c0_i32 = arith.constant 0 : i32
    %9 = arith.cmpi eq, %c16_i32, %c0_i32 : i32
    %c1_i32 = arith.constant 1 : i32
    %10 = arith.select %9, %c1_i32, %c16_i32 : i32
    %11 = vector.broadcast %10 : i32 to vector<32x32xi32>
    %12 = arith.remsi %8, %11 : vector<32x32xi32>
    %c0_i32_6 = arith.constant 0 : i32
    %13 = vector.broadcast %c0_i32_6 : i32 to vector<32x32xi32>
    %14 = arith.cmpi ne, %12, %13 : vector<32x32xi32>
    %c0_i32_7 = arith.constant 0 : i32
    %15 = vector.broadcast %c0_i32_7 : i32 to vector<32x32xi32>
    %16 = arith.cmpi slt, %12, %15 : vector<32x32xi32>
    %c0_i32_8 = arith.constant 0 : i32
    %17 = arith.cmpi slt, %10, %c0_i32_8 : i32
    %18 = vector.broadcast %17 : i1 to vector<32x32xi1>
    %19 = vector.broadcast %18 : vector<32x32xi1> to vector<32x32xi1>
    %20 = arith.xori %16, %19 : vector<32x32xi1>
    %21 = arith.andi %20, %14 : vector<32x32xi1>
    %22 = vector.broadcast %10 : i32 to vector<32x32xi32>
    %23 = arith.addi %12, %22 : vector<32x32xi32>
    %24 = arith.select %21, %23, %12 : vector<32x32xi1>, vector<32x32xi32>
    %c0_i32_9 = arith.constant 0 : i32
    %25 = vector.broadcast %c0_i32_9 : i32 to vector<32x32xi32>
    %26 = arith.cmpi ne, %24, %25 : vector<32x32xi32>
    %c15_i32 = arith.constant 15 : i32
    %27 = vector.broadcast %c15_i32 : i32 to vector<32x32xi32>
    %28 = arith.cmpi ne, %24, %27 : vector<32x32xi32>
    %29 = vector.extract_strided_slice %7 {offsets = [0, 0], sizes = [1, 32], strides = [1, 1]} : vector<6x32xf32> to vector<1x32xf32>
    %30 = vector.extract_strided_slice %7 {offsets = [1, 0], sizes = [1, 32], strides = [1, 1]} : vector<6x32xf32> to vector<1x32xf32>
    %c1_i32_10 = arith.constant 1 : i32
    %31 = tpu.dynamic_rotate %6 by %c1_i32_10 dim 0 : vector<32x32xf32>, i32 -> vector<32x32xf32>
    %cst = arith.constant 0.000000e+00 : f32
    %32 = vector.broadcast %cst : f32 to vector<32x32xf32>
    %33 = arith.select %26, %31, %32 : vector<32x32xi1>, vector<32x32xf32>
    %c31_i32 = arith.constant 31 : i32
    %34 = tpu.dynamic_rotate %6 by %c31_i32 dim 0 : vector<32x32xf32>, i32 -> vector<32x32xf32>
    %cst_11 = arith.constant 0.000000e+00 : f32
    %35 = vector.broadcast %cst_11 : f32 to vector<32x32xf32>
    %36 = arith.select %28, %34, %35 : vector<32x32xi1>, vector<32x32xf32>
    %c0_12 = arith.constant 0 : index
    %c0_13 = arith.constant 0 : index
    %c0_14 = arith.constant 0 : index
    %37 = vector.load %arg1[%c0_12, %c0_13, %c0_14] : memref<6x32x32xf32, #tpu.memory_space<vmem>>, vector<1x32x32xf32>
    %38 = vector.shape_cast %37 : vector<1x32x32xf32> to vector<32x32xf32>
    %cst_15 = arith.constant dense<0.000000e+00> : vector<32x32xf32>
    %39 = tpu.matmul %33, %38, %cst_15 {dimension_numbers = #tpu.dot_dimension_numbers<[1], [0], [0], [1], [0, 0, 1, 1], [], []>} : vector<32x32xf32>, vector<32x32xf32>, vector<32x32xf32> -> vector<32x32xf32>
    %c1_16 = arith.constant 1 : index
    %c0_17 = arith.constant 0 : index
    %c0_18 = arith.constant 0 : index
    %40 = vector.load %arg1[%c1_16, %c0_17, %c0_18] : memref<6x32x32xf32, #tpu.memory_space<vmem>>, vector<1x32x32xf32>
    %41 = vector.shape_cast %40 : vector<1x32x32xf32> to vector<32x32xf32>
    %cst_19 = arith.constant dense<0.000000e+00> : vector<32x32xf32>
    %42 = tpu.matmul %6, %41, %cst_19 {dimension_numbers = #tpu.dot_dimension_numbers<[1], [0], [0], [1], [0, 0, 1, 1], [], []>} : vector<32x32xf32>, vector<32x32xf32>, vector<32x32xf32> -> vector<32x32xf32>
    %43 = arith.addf %39, %42 : vector<32x32xf32>
    %c2 = arith.constant 2 : index
    %c0_20 = arith.constant 0 : index
    %c0_21 = arith.constant 0 : index
    %44 = vector.load %arg1[%c2, %c0_20, %c0_21] : memref<6x32x32xf32, #tpu.memory_space<vmem>>, vector<1x32x32xf32>
    %45 = vector.shape_cast %44 : vector<1x32x32xf32> to vector<32x32xf32>
    %cst_22 = arith.constant dense<0.000000e+00> : vector<32x32xf32>
    %46 = tpu.matmul %36, %45, %cst_22 {dimension_numbers = #tpu.dot_dimension_numbers<[1], [0], [0], [1], [0, 0, 1, 1], [], []>} : vector<32x32xf32>, vector<32x32xf32>, vector<32x32xf32> -> vector<32x32xf32>
    %47 = arith.addf %43, %46 : vector<32x32xf32>
    %cst_23 = arith.constant dense<0.000000e+00> : vector<32xf32>
    %48 = vector.multi_reduction <add>, %47, %cst_23 [0] : vector<32x32xf32> to vector<32xf32>
    %49 = vector.shape_cast %48 : vector<32xf32> to vector<1x32xf32>
    %cst_24 = arith.constant 3.200000e+01 : f32
    %50 = vector.broadcast %cst_24 : f32 to vector<1x32xf32>
    %51 = arith.divf %49, %50 : vector<1x32xf32>
    %52 = vector.broadcast %51 : vector<1x32xf32> to vector<32x32xf32>
    %53 = arith.subf %47, %52 : vector<32x32xf32>
    %54 = arith.mulf %53, %53 : vector<32x32xf32>
    %cst_25 = arith.constant dense<0.000000e+00> : vector<32xf32>
    %55 = vector.multi_reduction <add>, %54, %cst_25 [0] : vector<32x32xf32> to vector<32xf32>
    %56 = vector.shape_cast %55 : vector<32xf32> to vector<1x32xf32>
    %cst_26 = arith.constant 3.200000e+01 : f32
    %57 = vector.broadcast %cst_26 : f32 to vector<1x32xf32>
    %58 = arith.divf %56, %57 : vector<1x32xf32>
    %cst_27 = arith.constant 9.99999974E-6 : f32
    %59 = vector.broadcast %cst_27 : f32 to vector<1x32xf32>
    %60 = arith.addf %58, %59 : vector<1x32xf32>
    %61 = math.rsqrt %60 : vector<1x32xf32>
    %62 = arith.mulf %29, %61 : vector<1x32xf32>
    %63 = vector.broadcast %62 : vector<1x32xf32> to vector<32x32xf32>
    %64 = arith.mulf %53, %63 : vector<32x32xf32>
    %65 = vector.broadcast %30 : vector<1x32xf32> to vector<32x32xf32>
    %66 = arith.addf %64, %65 : vector<32x32xf32>
    %cst_28 = arith.constant 0.000000e+00 : f32
    %67 = vector.broadcast %cst_28 : f32 to vector<32x32xf32>
    %68 = arith.maximumf %66, %67 : vector<32x32xf32>
    %69 = vector.extract_strided_slice %7 {offsets = [2, 0], sizes = [1, 32], strides = [1, 1]} : vector<6x32xf32> to vector<1x32xf32>
    %70 = vector.extract_strided_slice %7 {offsets = [3, 0], sizes = [1, 32], strides = [1, 1]} : vector<6x32xf32> to vector<1x32xf32>
    %c1_i32_29 = arith.constant 1 : i32
    %71 = tpu.dynamic_rotate %68 by %c1_i32_29 dim 0 : vector<32x32xf32>, i32 -> vector<32x32xf32>
    %cst_30 = arith.constant 0.000000e+00 : f32
    %72 = vector.broadcast %cst_30 : f32 to vector<32x32xf32>
    %73 = arith.select %26, %71, %72 : vector<32x32xi1>, vector<32x32xf32>
    %c31_i32_31 = arith.constant 31 : i32
    %74 = tpu.dynamic_rotate %68 by %c31_i32_31 dim 0 : vector<32x32xf32>, i32 -> vector<32x32xf32>
    %cst_32 = arith.constant 0.000000e+00 : f32
    %75 = vector.broadcast %cst_32 : f32 to vector<32x32xf32>
    %76 = arith.select %28, %74, %75 : vector<32x32xi1>, vector<32x32xf32>
    %c3 = arith.constant 3 : index
    %c0_33 = arith.constant 0 : index
    %c0_34 = arith.constant 0 : index
    %77 = vector.load %arg1[%c3, %c0_33, %c0_34] : memref<6x32x32xf32, #tpu.memory_space<vmem>>, vector<1x32x32xf32>
    %78 = vector.shape_cast %77 : vector<1x32x32xf32> to vector<32x32xf32>
    %cst_35 = arith.constant dense<0.000000e+00> : vector<32x32xf32>
    %79 = tpu.matmul %73, %78, %cst_35 {dimension_numbers = #tpu.dot_dimension_numbers<[1], [0], [0], [1], [0, 0, 1, 1], [], []>} : vector<32x32xf32>, vector<32x32xf32>, vector<32x32xf32> -> vector<32x32xf32>
    %c4 = arith.constant 4 : index
    %c0_36 = arith.constant 0 : index
    %c0_37 = arith.constant 0 : index
    %80 = vector.load %arg1[%c4, %c0_36, %c0_37] : memref<6x32x32xf32, #tpu.memory_space<vmem>>, vector<1x32x32xf32>
    %81 = vector.shape_cast %80 : vector<1x32x32xf32> to vector<32x32xf32>
    %cst_38 = arith.constant dense<0.000000e+00> : vector<32x32xf32>
    %82 = tpu.matmul %68, %81, %cst_38 {dimension_numbers = #tpu.dot_dimension_numbers<[1], [0], [0], [1], [0, 0, 1, 1], [], []>} : vector<32x32xf32>, vector<32x32xf32>, vector<32x32xf32> -> vector<32x32xf32>
    %83 = arith.addf %79, %82 : vector<32x32xf32>
    %c5 = arith.constant 5 : index
    %c0_39 = arith.constant 0 : index
    %c0_40 = arith.constant 0 : index
    %84 = vector.load %arg1[%c5, %c0_39, %c0_40] : memref<6x32x32xf32, #tpu.memory_space<vmem>>, vector<1x32x32xf32>
    %85 = vector.shape_cast %84 : vector<1x32x32xf32> to vector<32x32xf32>
    %cst_41 = arith.constant dense<0.000000e+00> : vector<32x32xf32>
    %86 = tpu.matmul %76, %85, %cst_41 {dimension_numbers = #tpu.dot_dimension_numbers<[1], [0], [0], [1], [0, 0, 1, 1], [], []>} : vector<32x32xf32>, vector<32x32xf32>, vector<32x32xf32> -> vector<32x32xf32>
    %87 = arith.addf %83, %86 : vector<32x32xf32>
    %cst_42 = arith.constant dense<0.000000e+00> : vector<32xf32>
    %88 = vector.multi_reduction <add>, %87, %cst_42 [0] : vector<32x32xf32> to vector<32xf32>
    %89 = vector.shape_cast %88 : vector<32xf32> to vector<1x32xf32>
    %cst_43 = arith.constant 3.200000e+01 : f32
    %90 = vector.broadcast %cst_43 : f32 to vector<1x32xf32>
    %91 = arith.divf %89, %90 : vector<1x32xf32>
    %92 = vector.broadcast %91 : vector<1x32xf32> to vector<32x32xf32>
    %93 = arith.subf %87, %92 : vector<32x32xf32>
    %94 = arith.mulf %93, %93 : vector<32x32xf32>
    %cst_44 = arith.constant dense<0.000000e+00> : vector<32xf32>
    %95 = vector.multi_reduction <add>, %94, %cst_44 [0] : vector<32x32xf32> to vector<32xf32>
    %96 = vector.shape_cast %95 : vector<32xf32> to vector<1x32xf32>
    %cst_45 = arith.constant 3.200000e+01 : f32
    %97 = vector.broadcast %cst_45 : f32 to vector<1x32xf32>
    %98 = arith.divf %96, %97 : vector<1x32xf32>
    %cst_46 = arith.constant 9.99999974E-6 : f32
    %99 = vector.broadcast %cst_46 : f32 to vector<1x32xf32>
    %100 = arith.addf %98, %99 : vector<1x32xf32>
    %101 = math.rsqrt %100 : vector<1x32xf32>
    %102 = arith.mulf %69, %101 : vector<1x32xf32>
    %103 = vector.broadcast %102 : vector<1x32xf32> to vector<32x32xf32>
    %104 = arith.mulf %93, %103 : vector<32x32xf32>
    %105 = vector.broadcast %70 : vector<1x32xf32> to vector<32x32xf32>
    %106 = arith.addf %104, %105 : vector<32x32xf32>
    %c0_47 = arith.constant 0 : index
    %c0_48 = arith.constant 0 : index
    %c0_49 = arith.constant 0 : index
    %107 = vector.load %arg2[%c0_47, %c0_48, %c0_49] : memref<2x4x32xf32, #tpu.memory_space<vmem>>, vector<2x4x32xf32>
    %108 = vector.shape_cast %106 : vector<32x32xf32> to vector<2x16x32xf32>
    %cst_50 = arith.constant dense<0.000000e+00> : vector<2x32xf32>
    %109 = vector.multi_reduction <add>, %108, %cst_50 [1] : vector<2x16x32xf32> to vector<2x32xf32>
    %cst_51 = arith.constant 1.600000e+01 : f32
    %110 = vector.broadcast %cst_51 : f32 to vector<2x32xf32>
    %111 = arith.divf %109, %110 : vector<2x32xf32>
    %112 = vector.shape_cast %111 : vector<2x32xf32> to vector<2x1x32xf32>
    %113 = vector.extract_strided_slice %107 {offsets = [0, 0, 0], sizes = [1, 4, 32], strides = [1, 1, 1]} : vector<2x4x32xf32> to vector<1x4x32xf32>
    %114 = vector.shape_cast %113 : vector<1x4x32xf32> to vector<4x32xf32>
    %115 = vector.shape_cast %114 : vector<4x32xf32> to vector<1x4x32xf32>
    %116 = vector.broadcast %112 : vector<2x1x32xf32> to vector<2x4x32xf32>
    %117 = vector.broadcast %115 : vector<1x4x32xf32> to vector<2x4x32xf32>
    %118 = arith.mulf %116, %117 : vector<2x4x32xf32>
    %cst_52 = arith.constant dense<0.000000e+00> : vector<2x4xf32>
    %119 = vector.multi_reduction <add>, %118, %cst_52 [2] : vector<2x4x32xf32> to vector<2x4xf32>
    %120 = vector.extract_strided_slice %7 {offsets = [4, 0], sizes = [1, 4], strides = [1, 1]} : vector<6x32xf32> to vector<1x4xf32>
    %121 = vector.broadcast %120 : vector<1x4xf32> to vector<2x4xf32>
    %122 = arith.addf %119, %121 : vector<2x4xf32>
    %cst_53 = arith.constant 0.000000e+00 : f32
    %123 = vector.broadcast %cst_53 : f32 to vector<2x4xf32>
    %124 = arith.maximumf %122, %123 : vector<2x4xf32>
    %125 = vector.shape_cast %124 : vector<2x4xf32> to vector<2x4x1xf32>
    %126 = vector.extract_strided_slice %107 {offsets = [1, 0, 0], sizes = [1, 4, 32], strides = [1, 1, 1]} : vector<2x4x32xf32> to vector<1x4x32xf32>
    %127 = vector.shape_cast %126 : vector<1x4x32xf32> to vector<4x32xf32>
    %128 = vector.shape_cast %127 : vector<4x32xf32> to vector<1x4x32xf32>
    %129 = vector.broadcast %125 : vector<2x4x1xf32> to vector<2x4x32xf32>
    %130 = vector.broadcast %128 : vector<1x4x32xf32> to vector<2x4x32xf32>
    %131 = arith.mulf %129, %130 : vector<2x4x32xf32>
    %cst_54 = arith.constant dense<0.000000e+00> : vector<2x32xf32>
    %132 = vector.multi_reduction <add>, %131, %cst_54 [1] : vector<2x4x32xf32> to vector<2x32xf32>
    %133 = vector.extract_strided_slice %7 {offsets = [5, 0], sizes = [1, 32], strides = [1, 1]} : vector<6x32xf32> to vector<1x32xf32>
    %134 = vector.broadcast %133 : vector<1x32xf32> to vector<2x32xf32>
    %135 = arith.addf %132, %134 : vector<2x32xf32>
    %136 = arith.negf %135 : vector<2x32xf32>
    %137 = math.exp %136 : vector<2x32xf32>
    %cst_55 = arith.constant 1.000000e+00 : f32
    %138 = vector.broadcast %cst_55 : f32 to vector<2x32xf32>
    %139 = arith.addf %138, %137 : vector<2x32xf32>
    %140 = arith.divf %138, %139 : vector<2x32xf32>
    %141 = vector.shape_cast %6 : vector<32x32xf32> to vector<2x16x32xf32>
    %142 = vector.shape_cast %140 : vector<2x32xf32> to vector<2x1x32xf32>
    %143 = vector.broadcast %142 : vector<2x1x32xf32> to vector<2x16x32xf32>
    %144 = arith.mulf %108, %143 : vector<2x16x32xf32>
    %145 = arith.addf %141, %144 : vector<2x16x32xf32>
    %cst_56 = arith.constant 0.000000e+00 : f32
    %146 = vector.broadcast %cst_56 : f32 to vector<2x16x32xf32>
    %147 = arith.maximumf %145, %146 : vector<2x16x32xf32>
    %148 = vector.extract_strided_slice %147 {offsets = [0, 0, 0], sizes = [1, 16, 32], strides = [1, 1, 1]} : vector<2x16x32xf32> to vector<1x16x32xf32>
    %149 = vector.shape_cast %148 : vector<1x16x32xf32> to vector<16x32xf32>
    %150 = tpu.transpose %149, [1, 0] : vector<16x32xf32> -> vector<32x16xf32>
    %c0_57 = arith.constant 0 : index
    %c0_58 = arith.constant 0 : index
    %c0_59 = arith.constant 0 : index
    %151 = vector.load %arg4[%c0_57, %c0_58, %c0_59] : memref<2x32x16xf32, #tpu.memory_space<vmem>>, vector<1x32x16xf32>
    %152 = vector.shape_cast %151 : vector<1x32x16xf32> to vector<32x16xf32>
    %153 = vector.shape_cast %150 : vector<32x16xf32> to vector<1x32x16xf32>
    tpu.vector_store %arg4[%c0_57, %c0_58, %c0_59], %153 {strides = array<i32>} : memref<2x32x16xf32, #tpu.memory_space<vmem>>, vector<1x32x16xf32>,
    %154 = vector.extract_strided_slice %147 {offsets = [1, 0, 0], sizes = [1, 16, 32], strides = [1, 1, 1]} : vector<2x16x32xf32> to vector<1x16x32xf32>
    %155 = vector.shape_cast %154 : vector<1x16x32xf32> to vector<16x32xf32>
    %156 = tpu.transpose %155, [1, 0] : vector<16x32xf32> -> vector<32x16xf32>
    %c1_60 = arith.constant 1 : index
    %c0_61 = arith.constant 0 : index
    %c0_62 = arith.constant 0 : index
    %157 = vector.load %arg4[%c1_60, %c0_61, %c0_62] : memref<2x32x16xf32, #tpu.memory_space<vmem>>, vector<1x32x16xf32>
    %158 = vector.shape_cast %157 : vector<1x32x16xf32> to vector<32x16xf32>
    %159 = vector.shape_cast %156 : vector<32x16xf32> to vector<1x32x16xf32>
    tpu.vector_store %arg4[%c1_60, %c0_61, %c0_62], %159 {strides = array<i32>} : memref<2x32x16xf32, #tpu.memory_space<vmem>>, vector<1x32x16xf32>,
    return
  }
}

</mosaic_0001>

<llo_original>
// kernel: tpu_custom_call.1
$region0: #{tpu_custom_call.1}
  #allocation0 [shape = 'u32[]', space=smem, size = 0x4, offset = 0x4, fixed_abs, tag = 'smem constant byte address 0x4 - core index']
  #allocation1 [shape = 'u32[144,128]{1,0:T(1,128)}', space=vmem, size = 0x12000, scoped, tag = 'internal scratch']
  %s0 = inlined_call_operand.vmem [shape: f32[2,32,16], index: 0, kind: input, shape index: {}]
  %s1 = inlined_call_operand.hbm [shape: f32[6,32,32], index: 1, kind: input, shape index: {}]
  %s2 = inlined_call_operand.vmem [shape: f32[2,4,32], index: 2, kind: input, shape index: {}]
  %s3 = inlined_call_operand.vmem [shape: f32[6,32], index: 3, kind: input, shape index: {}]
  %s4 = inlined_call_operand.vmem [shape: f32[2,32,16], index: 4, kind: output, shape index: {}]
  %s5 = sld [smem:[#allocation0]]
  $region30: #{tpu_custom_call.1} parent=0
    _
  %s7 = ssub.s32 1, %s5
  %s8 = scalar_select 0, %s7, %s5
  $region1: #{tpu_custom_call.1} parent=0
    #allocation2 [shape = 'u8[98304]{0}', space=vmem, size = 0x18000, scoped, tag = 'input window, operand 1, single buffered']
    #allocation3 [shape = 's32[1]{0}', space=sflag, size = 0x4, scoped, tag = 'scoped memory for tpu_custom_call.1']
    %9 = vsyncpa [#allocation3], 0
    // Predicated region
    $region2: #{tpu_custom_call.1} parent=1 // pred_check
      _
    $region3: #{tpu_custom_call.1} parent=1 // pred_check_branch
      %11 = sbr.rel (0) target = $region5
    $region4: #{tpu_custom_call.1} parent=1 // pred_region
      _
    $region5: #{tpu_custom_call.1} parent=1 // pred_fallthru
      _
    // Predicated region
    $region6: #{tpu_custom_call.1} parent=1 // pred_check
      _
    $region7: #{tpu_custom_call.1} parent=1 // pred_check_branch
      %13 = sbr.rel (0) target = $region9
    $region8: #{tpu_custom_call.1} parent=1 // pred_region
      %s15 = ssub.s32 3072, 3072
      %16 = vsyncadd [#allocation3], %s15
      %s17 = sshll.u32 [#allocation2], 4
      %s18 = int_to_ptr.vmem [resolvable:$true] %s17
      %23 = dma.hbm_to_vmem [thread:$0]  %s1, 3072, %s18, [#allocation3], 128, 128, 8
    $region9: #{tpu_custom_call.1} parent=1 // pred_fallthru
      _
    // Predicated region
    $region10: #{tpu_custom_call.1} parent=1 // pred_check
      _
    $region11: #{tpu_custom_call.1} parent=1 // pred_check_branch
      %25 = sbr.rel (0) target = $region13
    $region12: #{tpu_custom_call.1} parent=1 // pred_region
      _
    $region13: #{tpu_custom_call.1} parent=1 // pred_fallthru
      _
    // Predicated region
    $region14: #{tpu_custom_call.1} parent=1 // pred_check
      _
    $region15: #{tpu_custom_call.1} parent=1 // pred_check_branch
      %27 = sbr.rel (0) target = $region17
    $region16: #{tpu_custom_call.1} parent=1 // pred_region
      _
    $region17: #{tpu_custom_call.1} parent=1 // pred_fallthru
      _
    // Predicated region
    $region18: #{tpu_custom_call.1} parent=1 // pred_check
      _
    $region19: #{tpu_custom_call.1} parent=1 // pred_check_branch
      %29 = sbr.rel (0) target = $region21
    $region20: #{tpu_custom_call.1} parent=1 // pred_region
      %30 = dma.done [#allocation3], 3072
    $region21: #{tpu_custom_call.1} parent=1 // pred_fallthru
      _
    %v31 = vld [vmem:[%s0] sm:$0xff]
    %v32 = vld [vmem:[%s0 + $0x8] sm:$0xff]
    %v33 = vld [vmem:[%s0 + $0x10] sm:$0xff]
    %v34 = vld [vmem:[%s0 + $0x18] sm:$0xff]
    %35 = vxpose.xlu0.b32.start [1/16] %v31, 128
    %36 = vxpose.xlu0.b32.cont [2/16] %v32, 128
    %37 = vxpose.xlu0.b32.cont [3/16] %v33, 128
    %38 = vxpose.xlu0.b32.cont [4/16] %v34, 128
    %39 = vxpose.xlu0.b32.cont [5/16] 0.0, 128
    %40 = vxpose.xlu0.b32.cont [6/16] 0.0, 128
    %41 = vxpose.xlu0.b32.cont [7/16] 0.0, 128
    %42 = vxpose.xlu0.b32.cont [8/16] 0.0, 128
    %43 = vxpose.xlu0.b32.cont [9/16] 0.0, 128
    %44 = vxpose.xlu0.b32.cont [10/16] 0.0, 128
    %45 = vxpose.xlu0.b32.cont [11/16] 0.0, 128
    %46 = vxpose.xlu0.b32.cont [12/16] 0.0, 128
    %47 = vxpose.xlu0.b32.cont [13/16] 0.0, 128
    %48 = vxpose.xlu0.b32.cont [14/16] 0.0, 128
    %49 = vxpose.xlu0.b32.cont [15/16] 0.0, 128
    %50 = vxpose.xlu0.b32.end [16/16] 0.0, 128
    %v51 = vpop.trf.xlu0
    %v52 = vpop.trf.xlu0
    %v53 = vpop.trf.xlu0
    %v54 = vpop.trf.xlu0
    %v55 = vpop.trf.xlu0
    %v56 = vpop.trf.xlu0
    %v57 = vpop.trf.xlu0
    %v58 = vpop.trf.xlu0
    %v59 = vpop.trf.xlu0
    %v60 = vpop.trf.xlu0
    %v61 = vpop.trf.xlu0
    %v62 = vpop.trf.xlu0
    %v63 = vpop.trf.xlu0
    %v64 = vpop.trf.xlu0
    %v65 = vpop.trf.xlu0
    %v66 = vpop.trf.xlu0
    %s67 = scalar_lea.vmem %s0, 32
    %v68 = vld [vmem:[%s67] sm:$0xff]
    %v69 = vld [vmem:[%s67 + $0x8] sm:$0xff]
    %v70 = vld [vmem:[%s67 + $0x10] sm:$0xff]
    %v71 = vld [vmem:[%s67 + $0x18] sm:$0xff]
    %72 = vxpose.xlu0.b32.start [1/16] %v68, 128
    %73 = vxpose.xlu0.b32.cont [2/16] %v69, 128
    %74 = vxpose.xlu0.b32.cont [3/16] %v70, 128
    %75 = vxpose.xlu0.b32.cont [4/16] %v71, 128
    %76 = vxpose.xlu0.b32.cont [5/16] 0.0, 128
    %77 = vxpose.xlu0.b32.cont [6/16] 0.0, 128
    %78 = vxpose.xlu0.b32.cont [7/16] 0.0, 128
    %79 = vxpose.xlu0.b32.cont [8/16] 0.0, 128
    %80 = vxpose.xlu0.b32.cont [9/16] 0.0, 128
    %81 = vxpose.xlu0.b32.cont [10/16] 0.0, 128
    %82 = vxpose.xlu0.b32.cont [11/16] 0.0, 128
    %83 = vxpose.xlu0.b32.cont [12/16] 0.0, 128
    %84 = vxpose.xlu0.b32.cont [13/16] 0.0, 128
    %85 = vxpose.xlu0.b32.cont [14/16] 0.0, 128
    %86 = vxpose.xlu0.b32.cont [15/16] 0.0, 128
    %87 = vxpose.xlu0.b32.end [16/16] 0.0, 128
    %v88 = vpop.trf.xlu0
    %v89 = vpop.trf.xlu0
    %v90 = vpop.trf.xlu0
    %v91 = vpop.trf.xlu0
    %v92 = vpop.trf.xlu0
    %v93 = vpop.trf.xlu0
    %v94 = vpop.trf.xlu0
    %v95 = vpop.trf.xlu0
    %v96 = vpop.trf.xlu0
    %v97 = vpop.trf.xlu0
    %v98 = vpop.trf.xlu0
    %v99 = vpop.trf.xlu0
    %v100 = vpop.trf.xlu0
    %v101 = vpop.trf.xlu0
    %v102 = vpop.trf.xlu0
    %v103 = vpop.trf.xlu0
    %v104 = vld [vmem:[%s3] sm:$0x3f]
    %v105 = vlaneseq
    %v106 = vshrl.u32 %v105, 7
    %v107 = vadd.s32 %v106, 8
    %v108 = vadd.s32 %v106, 16
    %v109 = vadd.s32 %v106, 24
    %vm110 = vcmp.lt.s32.totalorder %v106, 0
    %v111 = vsub.s32 0, %v106
    %v112 = vsel %vm110, %v111, %v106
    %v113 = vshrl.u32 %v112, 4
    %v114 = vand.u32 %v112, 15
    %v115 = vsub.s32 0, %v114
    %v116 = vsel %vm110, %v115, %v114
    %vm117 = vcmp.lt.s32.totalorder %v107, 0
    %v118 = vsub.s32 0, %v107
    %v119 = vsel %vm117, %v118, %v107
    %v120 = vshrl.u32 %v119, 4
    %v121 = vand.u32 %v119, 15
    %v122 = vsub.s32 0, %v121
    %v123 = vsel %vm117, %v122, %v121
    %vm124 = vcmp.lt.s32.totalorder %v108, 0
    %v125 = vsub.s32 0, %v108
    %v126 = vsel %vm124, %v125, %v108
    %v127 = vshrl.u32 %v126, 4
    %v128 = vand.u32 %v126, 15
    %v129 = vsub.s32 0, %v128
    %v130 = vsel %vm124, %v129, %v128
    %vm131 = vcmp.lt.s32.totalorder %v109, 0
    %v132 = vsub.s32 0, %v109
    %v133 = vsel %vm131, %v132, %v109
    %v134 = vshrl.u32 %v133, 4
    %v135 = vand.u32 %v133, 15
    %v136 = vsub.s32 0, %v135
    %v137 = vsel %vm131, %v136, %v135
    %vm138 = vcmp.ne.s32.totalorder %v116, 0
    %vm139 = vcmp.ne.s32.totalorder %v123, 0
    %vm140 = vcmp.ne.s32.totalorder %v130, 0
    %vm141 = vcmp.ne.s32.totalorder %v137, 0
    %vm142 = vcmp.lt.s32.totalorder %v116, 0
    %vm143 = vcmp.lt.s32.totalorder %v123, 0
    %vm144 = vcmp.lt.s32.totalorder %v130, 0
    %vm145 = vcmp.lt.s32.totalorder %v137, 0
    %vm146 = vmand %vm142, %vm138
    %vm147 = vmand %vm143, %vm139
    %vm148 = vmand %vm144, %vm140
    %vm149 = vmand %vm145, %vm141
    %v150 = vadd.s32 %v116, 16
    %v151 = vadd.s32 %v123, 16
    %v152 = vadd.s32 %v130, 16
    %v153 = vadd.s32 %v137, 16
    %v154 = vsel %vm146, %v150, %v116
    %v155 = vsel %vm147, %v151, %v123
    %v156 = vsel %vm148, %v152, %v130
    %v157 = vsel %vm149, %v153, %v137
    %vm158 = vcmp.ne.s32.totalorder %v154, 0
    %vm159 = vcmp.ne.s32.totalorder %v155, 0
    %vm160 = vcmp.ne.s32.totalorder %v156, 0
    %vm161 = vcmp.ne.s32.totalorder %v157, 0
    %vm162 = vcmp.ne.s32.totalorder %v154, 15
    %vm163 = vcmp.ne.s32.totalorder %v155, 15
    %vm164 = vcmp.ne.s32.totalorder %v156, 15
    %vm165 = vcmp.ne.s32.totalorder %v157, 15
    %v166 = vrot.slane %v51, 7
    %v167 = vrot.slane %v52, 7
    %v168 = vrot.slane %v88, 7
    %v169 = vrot.slane %v89, 7
    %vm170 = vcmp.lt.s32.totalorder %v106, 1
    %v171 = vsel %vm170, %v168, %v169
    %v172 = vsel %vm170, %v167, %v168
    %v173 = vsel %vm170, %v166, %v167
    %v174 = vsel %vm170, %v169, %v166
    %v175 = vsel %vm158, %v174, 0.0
    %v176 = vsel %vm159, %v173, 0.0
    %v177 = vsel %vm160, %v172, 0.0
    %v178 = vsel %vm161, %v171, 0.0
    %v179 = vrot.slane %v51, 1
    %v180 = vrot.slane %v52, 1
    %v181 = vrot.slane %v88, 1
    %v182 = vrot.slane %v89, 1
    %vm183 = vcmp.lt.s32.totalorder %v106, 7
    %v184 = vsel %vm183, %v181, %v182
    %v185 = vsel %vm183, %v180, %v181
    %v186 = vsel %vm183, %v179, %v180
    %v187 = vsel %vm183, %v182, %v179
    %v188 = vsel %vm162, %v186, 0.0
    %v189 = vsel %vm163, %v185, 0.0
    %v190 = vsel %vm164, %v184, 0.0
    %v191 = vsel %vm165, %v187, 0.0
    %v192 = vld [vmem:[#allocation2] sm:$0xff]
    %v193 = vld [vmem:[#allocation2 + $0x8] sm:$0xff]
    %v194 = vld [vmem:[#allocation2 + $0x10] sm:$0xff]
    %v195 = vld [vmem:[#allocation2 + $0x18] sm:$0xff]
    %s196 = scalar_lea.vmem [#allocation2], 32
    %v197 = vld [vmem:[%s196] sm:$0xff]
    %v198 = vld [vmem:[%s196 + $0x8] sm:$0xff]
    %v199 = vld [vmem:[%s196 + $0x10] sm:$0xff]
    %v200 = vld [vmem:[%s196 + $0x18] sm:$0xff]
    %vm201 = vcmask 261120
    %v203 = vsel %vm201, %v51, 0
    %v206 = vsel %vm201, %v52, 0
    %v209 = vsel %vm201, %v88, 0
    %v212 = vsel %vm201, %v89, 0
    %214 = vmatprep.subr.mxu0 0.0
    %215 = vmatpush1.msra.mxu0 %v197
    %216 = vmatprep.subr.mxu0 0.0
    %217 = vmatpush1.msra.mxu0 %v198
    %218 = vmatprep.subr.mxu0 0.0
    %219 = vmatpush1.msra.mxu0 %v199
    %220 = vmatprep.subr.mxu0 0.0
    %221 = vmatpush1.msra.mxu0 %v200
    %222 = vmatprep.subr.mxu0 0.0
    %223 = vmatpush1.msra.mxu0 0.0
    %224 = vmatprep.subr.mxu0 0.0
    %225 = vmatpush1.msra.mxu0 0.0
    %226 = vmatprep.subr.mxu0 0.0
    %227 = vmatpush1.msra.mxu0 0.0
    %228 = vmatprep.subr.mxu0 0.0
    %229 = vmatpush1.msra.mxu0 0.0
    %230 = vmatprep.subr.mxu0 0.0
    %231 = vmatpush1.msra.mxu0 0.0
    %232 = vmatprep.subr.mxu0 0.0
    %233 = vmatpush1.msra.mxu0 0.0
    %234 = vmatprep.subr.mxu0 0.0
    %235 = vmatpush1.msra.mxu0 0.0
    %236 = vmatprep.subr.mxu0 0.0
    %237 = vmatpush1.msra.mxu0 0.0
    %238 = vmatprep.subr.mxu0 0.0
    %239 = vmatpush1.msra.mxu0 0.0
    %240 = vmatprep.subr.mxu0 0.0
    %241 = vmatpush1.msra.mxu0 0.0
    %242 = vmatprep.subr.mxu0 0.0
    %243 = vmatpush1.msra.mxu0 0.0
    %244 = vmatprep.subr.mxu0 0.0
    %245 = vmatpush1.msra.mxu0 0.0
    %246 = vmatprep.subr.mxu0 0.0
    %247 = vmatpush1.msra.mxu0 0.0
    %248 = vmatprep.subr.mxu0 0.0
    %249 = vmatpush1.msra.mxu0 0.0
    %250 = vmatprep.subr.mxu0 0.0
    %251 = vmatpush1.msra.mxu0 0.0
    %252 = vmatprep.subr.mxu0 0.0
    %253 = vmatpush1.msra.mxu0 0.0
    %254 = vmatprep.subr.mxu0 0.0
    %255 = vmatpush1.msra.mxu0 0.0
    %256 = vmatprep.subr.mxu0 0.0
    %257 = vmatpush1.msra.mxu0 0.0
    %258 = vmatprep.subr.mxu0 0.0
    %259 = vmatpush1.msra.mxu0 0.0
    %260 = vmatprep.subr.mxu0 0.0
    %261 = vmatpush1.msra.mxu0 0.0
    %262 = vmatprep.subr.mxu0 0.0
    %263 = vmatpush1.msra.mxu0 0.0
    %264 = vmatprep.subr.mxu0 0.0
    %265 = vmatpush1.msra.mxu0 0.0
    %266 = vmatprep.subr.mxu0 0.0
    %267 = vmatpush1.msra.mxu0 0.0
    %268 = vmatprep.subr.mxu0 0.0
    %269 = vmatpush1.msra.mxu0 0.0
    %270 = vmatprep.subr.mxu0 0.0
    %271 = vmatpush1.msra.mxu0 0.0
    %272 = vmatprep.subr.mxu0 0.0
    %273 = vmatpush1.msra.mxu0 0.0
    %274 = vmatprep.subr.mxu0 0.0
    %275 = vmatpush1.msra.mxu0 0.0
    %276 = vmatprep.subr.mxu0 0.0
    %277 = vmatpush1.msra.mxu0 0.0
    %278 = vmatprep.mubr.f32.mxu0 0.0
    %279 = vmatmul.mubr.f32.gmra.mrb[0].mxu0 %v203
    %v280 = vpop.f32.mrb[0].mxu0
    %v281 = vadd.f32 0.0, %v280
    %v282 = vpop.f32.mrb[0].mxu0
    %283 = vmatprep.mubr.f32.mxu0 0.0
    %284 = vmatmul.mubr.f32.gmra.mrb[0].mxu0 %v206
    %v285 = vpop.f32.mrb[0].mxu0
    %v286 = vadd.f32 0.0, %v285
    %v287 = vpop.f32.mrb[0].mxu0
    %288 = vmatprep.mubr.f32.mxu0 0.0
    %289 = vmatmul.mubr.f32.gmra.mrb[0].mxu0 %v209
    %v290 = vpop.f32.mrb[0].mxu0
    %v291 = vadd.f32 0.0, %v290
    %v292 = vpop.f32.mrb[0].mxu0
    %293 = vmatprep.mubr.f32.mxu0 0.0
    %294 = vmatmul.mubr.f32.gmra.mrb[0].mxu0 %v212
    %v295 = vpop.f32.mrb[0].mxu0
    %v296 = vadd.f32 0.0, %v295
    %v297 = vpop.f32.mrb[0].mxu0
    %298 = vdwg.mxu0
    %v300 = vsel %vm201, %v175, 0
    %v303 = vsel %vm201, %v176, 0
    %v306 = vsel %vm201, %v177, 0
    %v309 = vsel %vm201, %v178, 0
    %311 = vmatprep.subr.mxu0 0.0
    %312 = vmatpush1.msra.mxu0 %v192
    %313 = vmatprep.subr.mxu0 0.0
    %314 = vmatpush1.msra.mxu0 %v193
    %315 = vmatprep.subr.mxu0 0.0
    %316 = vmatpush1.msra.mxu0 %v194
    %317 = vmatprep.subr.mxu0 0.0
    %318 = vmatpush1.msra.mxu0 %v195
    %319 = vmatprep.subr.mxu0 0.0
    %320 = vmatpush1.msra.mxu0 0.0
    %321 = vmatprep.subr.mxu0 0.0
    %322 = vmatpush1.msra.mxu0 0.0
    %323 = vmatprep.subr.mxu0 0.0
    %324 = vmatpush1.msra.mxu0 0.0
    %325 = vmatprep.subr.mxu0 0.0
    %326 = vmatpush1.msra.mxu0 0.0
    %327 = vmatprep.subr.mxu0 0.0
    %328 = vmatpush1.msra.mxu0 0.0
    %329 = vmatprep.subr.mxu0 0.0
    %330 = vmatpush1.msra.mxu0 0.0
    %331 = vmatprep.subr.mxu0 0.0
    %332 = vmatpush1.msra.mxu0 0.0
    %333 = vmatprep.subr.mxu0 0.0
    %334 = vmatpush1.msra.mxu0 0.0
    %335 = vmatprep.subr.mxu0 0.0
    %336 = vmatpush1.msra.mxu0 0.0
    %337 = vmatprep.subr.mxu0 0.0
    %338 = vmatpush1.msra.mxu0 0.0
    %339 = vmatprep.subr.mxu0 0.0
    %340 = vmatpush1.msra.mxu0 0.0
    %341 = vmatprep.subr.mxu0 0.0
    %342 = vmatpush1.msra.mxu0 0.0
    %343 = vmatprep.subr.mxu0 0.0
    %344 = vmatpush1.msra.mxu0 0.0
    %345 = vmatprep.subr.mxu0 0.0
    %346 = vmatpush1.msra.mxu0 0.0
    %347 = vmatprep.subr.mxu0 0.0
    %348 = vmatpush1.msra.mxu0 0.0
    %349 = vmatprep.subr.mxu0 0.0
    %350 = vmatpush1.msra.mxu0 0.0
    %351 = vmatprep.subr.mxu0 0.0
    %352 = vmatpush1.msra.mxu0 0.0
    %353 = vmatprep.subr.mxu0 0.0
    %354 = vmatpush1.msra.mxu0 0.0
    %355 = vmatprep.subr.mxu0 0.0
    %356 = vmatpush1.msra.mxu0 0.0
    %357 = vmatprep.subr.mxu0 0.0
    %358 = vmatpush1.msra.mxu0 0.0
    %359 = vmatprep.subr.mxu0 0.0
    %360 = vmatpush1.msra.mxu0 0.0
    %361 = vmatprep.subr.mxu0 0.0
    %362 = vmatpush1.msra.mxu0 0.0
    %363 = vmatprep.subr.mxu0 0.0
    %364 = vmatpush1.msra.mxu0 0.0
    %365 = vmatprep.subr.mxu0 0.0
    %366 = vmatpush1.msra.mxu0 0.0
    %367 = vmatprep.subr.mxu0 0.0
    %368 = vmatpush1.msra.mxu0 0.0
    %369 = vmatprep.subr.mxu0 0.0
    %370 = vmatpush1.msra.mxu0 0.0
    %371 = vmatprep.subr.mxu0 0.0
    %372 = vmatpush1.msra.mxu0 0.0
    %373 = vmatprep.subr.mxu0 0.0
    %374 = vmatpush1.msra.mxu0 0.0
    %375 = vmatprep.mubr.f32.mxu0 0.0
    %376 = vmatmul.mubr.f32.gmra.mrb[0].mxu0 %v300
    %v377 = vpop.f32.mrb[0].mxu0
    %v378 = vadd.f32 %v281, %v377
    %v379 = vpop.f32.mrb[0].mxu0
    %380 = vmatprep.mubr.f32.mxu0 0.0
    %381 = vmatmul.mubr.f32.gmra.mrb[0].mxu0 %v303
    %v382 = vpop.f32.mrb[0].mxu0
    %v383 = vadd.f32 %v286, %v382
    %v384 = vpop.f32.mrb[0].mxu0
    %385 = vmatprep.mubr.f32.mxu0 0.0
    %386 = vmatmul.mubr.f32.gmra.mrb[0].mxu0 %v306
    %v387 = vpop.f32.mrb[0].mxu0
    %v388 = vadd.f32 %v291, %v387
    %v389 = vpop.f32.mrb[0].mxu0
    %390 = vmatprep.mubr.f32.mxu0 0.0
    %391 = vmatmul.mubr.f32.gmra.mrb[0].mxu0 %v309
    %v392 = vpop.f32.mrb[0].mxu0
    %v393 = vadd.f32 %v296, %v392
    %v394 = vpop.f32.mrb[0].mxu0
    %395 = vdwg.mxu0
    %s396 = scalar_lea.vmem [#allocation2], 64
    %v397 = vld [vmem:[%s396] sm:$0xff]
    %v398 = vld [vmem:[%s396 + $0x8] sm:$0xff]
    %v399 = vld [vmem:[%s396 + $0x10] sm:$0xff]
    %v400 = vld [vmem:[%s396 + $0x18] sm:$0xff]
    %v402 = vsel %vm201, %v188, 0
    %v405 = vsel %vm201, %v189, 0
    %v408 = vsel %vm201, %v190, 0
    %v411 = vsel %vm201, %v191, 0
    %413 = vmatprep.subr.mxu0 0.0
    %414 = vmatpush1.msra.mxu0 %v397
    %415 = vmatprep.subr.mxu0 0.0
    %416 = vmatpush1.msra.mxu0 %v398
    %417 = vmatprep.subr.mxu0 0.0
    %418 = vmatpush1.msra.mxu0 %v399
    %419 = vmatprep.subr.mxu0 0.0
    %420 = vmatpush1.msra.mxu0 %v400
    %421 = vmatprep.subr.mxu0 0.0
    %422 = vmatpush1.msra.mxu0 0.0
    %423 = vmatprep.subr.mxu0 0.0
    %424 = vmatpush1.msra.mxu0 0.0
    %425 = vmatprep.subr.mxu0 0.0
    %426 = vmatpush1.msra.mxu0 0.0
    %427 = vmatprep.subr.mxu0 0.0
    %428 = vmatpush1.msra.mxu0 0.0
    %429 = vmatprep.subr.mxu0 0.0
    %430 = vmatpush1.msra.mxu0 0.0
    %431 = vmatprep.subr.mxu0 0.0
    %432 = vmatpush1.msra.mxu0 0.0
    %433 = vmatprep.subr.mxu0 0.0
    %434 = vmatpush1.msra.mxu0 0.0
    %435 = vmatprep.subr.mxu0 0.0
    %436 = vmatpush1.msra.mxu0 0.0
    %437 = vmatprep.subr.mxu0 0.0
    %438 = vmatpush1.msra.mxu0 0.0
    %439 = vmatprep.subr.mxu0 0.0
    %440 = vmatpush1.msra.mxu0 0.0
    %441 = vmatprep.subr.mxu0 0.0
    %442 = vmatpush1.msra.mxu0 0.0
    %443 = vmatprep.subr.mxu0 0.0
    %444 = vmatpush1.msra.mxu0 0.0
    %445 = vmatprep.subr.mxu0 0.0
    %446 = vmatpush1.msra.mxu0 0.0
    %447 = vmatprep.subr.mxu0 0.0
    %448 = vmatpush1.msra.mxu0 0.0
    %449 = vmatprep.subr.mxu0 0.0
    %450 = vmatpush1.msra.mxu0 0.0
    %451 = vmatprep.subr.mxu0 0.0
    %452 = vmatpush1.msra.mxu0 0.0
    %453 = vmatprep.subr.mxu0 0.0
    %454 = vmatpush1.msra.mxu0 0.0
    %455 = vmatprep.subr.mxu0 0.0
    %456 = vmatpush1.msra.mxu0 0.0
    %457 = vmatprep.subr.mxu0 0.0
    %458 = vmatpush1.msra.mxu0 0.0
    %459 = vmatprep.subr.mxu0 0.0
    %460 = vmatpush1.msra.mxu0 0.0
    %461 = vmatprep.subr.mxu0 0.0
    %462 = vmatpush1.msra.mxu0 0.0
    %463 = vmatprep.subr.mxu0 0.0
    %464 = vmatpush1.msra.mxu0 0.0
    %465 = vmatprep.subr.mxu0 0.0
    %466 = vmatpush1.msra.mxu0 0.0
    %467 = vmatprep.subr.mxu0 0.0
    %468 = vmatpush1.msra.mxu0 0.0
    %469 = vmatprep.subr.mxu0 0.0
    %470 = vmatpush1.msra.mxu0 0.0
    %471 = vmatprep.subr.mxu0 0.0
    %472 = vmatpush1.msra.mxu0 0.0
    %473 = vmatprep.subr.mxu0 0.0
    %474 = vmatpush1.msra.mxu0 0.0
    %475 = vmatprep.subr.mxu0 0.0
    %476 = vmatpush1.msra.mxu0 0.0
    %477 = vmatprep.mubr.f32.mxu0 0.0
    %478 = vmatmul.mubr.f32.gmra.mrb[0].mxu0 %v402
    %v479 = vpop.f32.mrb[0].mxu0
    %v480 = vadd.f32 0.0, %v479
    %v481 = vpop.f32.mrb[0].mxu0
    %482 = vmatprep.mubr.f32.mxu0 0.0
    %483 = vmatmul.mubr.f32.gmra.mrb[0].mxu0 %v405
    %v484 = vpop.f32.mrb[0].mxu0
    %v485 = vadd.f32 0.0, %v484
    %v486 = vpop.f32.mrb[0].mxu0
    %487 = vmatprep.mubr.f32.mxu0 0.0
    %488 = vmatmul.mubr.f32.gmra.mrb[0].mxu0 %v408
    %v489 = vpop.f32.mrb[0].mxu0
    %v490 = vadd.f32 0.0, %v489
    %v491 = vpop.f32.mrb[0].mxu0
    %492 = vmatprep.mubr.f32.mxu0 0.0
    %493 = vmatmul.mubr.f32.gmra.mrb[0].mxu0 %v411
    %v494 = vpop.f32.mrb[0].mxu0
    %v495 = vadd.f32 0.0, %v494
    %v496 = vpop.f32.mrb[0].mxu0
    %497 = vdwg.mxu0
    %v498 = vadd.f32 %v378, %v480
    %v499 = vadd.f32 %v383, %v485
    %v500 = vadd.f32 %v388, %v490
    %v501 = vadd.f32 %v393, %v495
    %v502 = vsel %vm201, %v498, 0.0
    %v503 = vsel %vm201, %v499, 0.0
    %v504 = vadd.f32 %v502, %v503
    %v505 = vsel %vm201, %v500, 0.0
    %v506 = vadd.f32 %v504, %v505
    %v507 = vsel %vm201, %v501, 0.0
    %v508 = vadd.f32 %v506, %v507
    %v509 = vrot.slane %v508, 4
    %v510 = vadd.f32 %v508, %v509
    %v511 = vrot.slane %v510, 2
    %v512 = vadd.f32 %v510, %v511
    %v513 = vrot.slane %v512, 1
    %v514 = vadd.f32 %v512, %v513
    %v515 = vrcp.pop 32.0
    %v516 = vmul.f32 %v514, %v515
    %v517 = vsub.f32 %v498, %v516
    %v518 = vsub.f32 %v499, %v516
    %v519 = vsub.f32 %v500, %v516
    %v520 = vsub.f32 %v501, %v516
    %v521 = vmul.f32 %v517, %v517
    %v522 = vmul.f32 %v518, %v518
    %v523 = vmul.f32 %v519, %v519
    %v524 = vmul.f32 %v520, %v520
    %v525 = vsel %vm201, %v521, 0.0
    %v526 = vsel %vm201, %v522, 0.0
    %v527 = vadd.f32 %v525, %v526
    %v528 = vsel %vm201, %v523, 0.0
    %v529 = vadd.f32 %v527, %v528
    %v530 = vsel %vm201, %v524, 0.0
    %v531 = vadd.f32 %v529, %v530
    %v532 = vrot.slane %v531, 4
    %v533 = vadd.f32 %v531, %v532
    %v534 = vrot.slane %v533, 2
    %v535 = vadd.f32 %v533, %v534
    %v536 = vrot.slane %v535, 1
    %v537 = vadd.f32 %v535, %v536
    %v538 = vmul.f32 %v537, %v515
    %v539 = vadd.f32 %v538, 1e-05
    %v540 = vrsqrt.pop %v539
    %v541 = vmul.f32 %v104, %v540
    %v542 = vlaneseq
    %v543 = vshrl.u32 %v542, 7
    %v544 = vsub.s32 0, %v543
    %v545 = vrot.slane %v541, %v544
    %v546 = vmul.f32 %v517, %v545
    %v547 = vmul.f32 %v518, %v545
    %v548 = vmul.f32 %v519, %v545
    %v549 = vmul.f32 %v520, %v545
    %v550 = vlaneseq
    %v551 = vshrl.u32 %v550, 7
    %v552 = vsub.s32 1, %v551
    %v553 = vrot.slane %v104, %v552
    %v554 = vadd.f32 %v546, %v553
    %v555 = vadd.f32 %v547, %v553
    %v556 = vadd.f32 %v548, %v553
    %v557 = vadd.f32 %v549, %v553
    %v558 = vmax.f32 %v554, 0.0
    %v559 = vmax.f32 %v555, 0.0
    %v560 = vmax.f32 %v556, 0.0
    %v561 = vmax.f32 %v557, 0.0
    %v562 = vrot.slane %v558, 7
    %v563 = vrot.slane %v559, 7
    %v564 = vrot.slane %v560, 7
    %v565 = vrot.slane %v561, 7
    %v566 = vsel %vm170, %v564, %v565
    %v567 = vsel %vm170, %v563, %v564
    %v568 = vsel %vm170, %v562, %v563
    %v569 = vsel %vm170, %v565, %v562
    %v570 = vsel %vm158, %v569, 0.0
    %v571 = vsel %vm159, %v568, 0.0
    %v572 = vsel %vm160, %v567, 0.0
    %v573 = vsel %vm161, %v566, 0.0
    %v574 = vrot.slane %v558, 1
    %v575 = vrot.slane %v559, 1
    %v576 = vrot.slane %v560, 1
    %v577 = vrot.slane %v561, 1
    %v578 = vsel %vm183, %v576, %v577
    %v579 = vsel %vm183, %v575, %v576
    %v580 = vsel %vm183, %v574, %v575
    %v581 = vsel %vm183, %v577, %v574
    %v582 = vsel %vm162, %v580, 0.0
    %v583 = vsel %vm163, %v579, 0.0
    %v584 = vsel %vm164, %v578, 0.0
    %v585 = vsel %vm165, %v581, 0.0
    %s586 = scalar_lea.vmem [#allocation2], 96
    %v587 = vld [vmem:[%s586] sm:$0xff]
    %v588 = vld [vmem:[%s586 + $0x8] sm:$0xff]
    %v589 = vld [vmem:[%s586 + $0x10] sm:$0xff]
    %v590 = vld [vmem:[%s586 + $0x18] sm:$0xff]
    %s591 = scalar_lea.vmem [#allocation2], 128
    %v592 = vld [vmem:[%s591] sm:$0xff]
    %v593 = vld [vmem:[%s591 + $0x8] sm:$0xff]
    %v594 = vld [vmem:[%s591 + $0x10] sm:$0xff]
    %v595 = vld [vmem:[%s591 + $0x18] sm:$0xff]
    %v597 = vsel %vm201, %v558, 0
    %v600 = vsel %vm201, %v559, 0
    %v603 = vsel %vm201, %v560, 0
    %v606 = vsel %vm201, %v561, 0
    %608 = vmatprep.subr.mxu0 0.0
    %609 = vmatpush1.msra.mxu0 %v592
    %610 = vmatprep.subr.mxu0 0.0
    %611 = vmatpush1.msra.mxu0 %v593
    %612 = vmatprep.subr.mxu0 0.0
    %613 = vmatpush1.msra.mxu0 %v594
    %614 = vmatprep.subr.mxu0 0.0
    %615 = vmatpush1.msra.mxu0 %v595
    %616 = vmatprep.subr.mxu0 0.0
    %617 = vmatpush1.msra.mxu0 0.0
    %618 = vmatprep.subr.mxu0 0.0
    %619 = vmatpush1.msra.mxu0 0.0
    %620 = vmatprep.subr.mxu0 0.0
    %621 = vmatpush1.msra.mxu0 0.0
    %622 = vmatprep.subr.mxu0 0.0
    %623 = vmatpush1.msra.mxu0 0.0
    %624 = vmatprep.subr.mxu0 0.0
    %625 = vmatpush1.msra.mxu0 0.0
    %626 = vmatprep.subr.mxu0 0.0
    %627 = vmatpush1.msra.mxu0 0.0
    %628 = vmatprep.subr.mxu0 0.0
    %629 = vmatpush1.msra.mxu0 0.0
    %630 = vmatprep.subr.mxu0 0.0
    %631 = vmatpush1.msra.mxu0 0.0
    %632 = vmatprep.subr.mxu0 0.0
    %633 = vmatpush1.msra.mxu0 0.0
    %634 = vmatprep.subr.mxu0 0.0
    %635 = vmatpush1.msra.mxu0 0.0
    %636 = vmatprep.subr.mxu0 0.0
    %637 = vmatpush1.msra.mxu0 0.0
    %638 = vmatprep.subr.mxu0 0.0
    %639 = vmatpush1.msra.mxu0 0.0
    %640 = vmatprep.subr.mxu0 0.0
    %641 = vmatpush1.msra.mxu0 0.0
    %642 = vmatprep.subr.mxu0 0.0
    %643 = vmatpush1.msra.mxu0 0.0
    %644 = vmatprep.subr.mxu0 0.0
    %645 = vmatpush1.msra.mxu0 0.0
    %646 = vmatprep.subr.mxu0 0.0
    %647 = vmatpush1.msra.mxu0 0.0
    %648 = vmatprep.subr.mxu0 0.0
    %649 = vmatpush1.msra.mxu0 0.0
    %650 = vmatprep.subr.mxu0 0.0
    %651 = vmatpush1.msra.mxu0 0.0
    %652 = vmatprep.subr.mxu0 0.0
    %653 = vmatpush1.msra.mxu0 0.0
    %654 = vmatprep.subr.mxu0 0.0
    %655 = vmatpush1.msra.mxu0 0.0
    %656 = vmatprep.subr.mxu0 0.0
    %657 = vmatpush1.msra.mxu0 0.0
    %658 = vmatprep.subr.mxu0 0.0
    %659 = vmatpush1.msra.mxu0 0.0
    %660 = vmatprep.subr.mxu0 0.0
    %661 = vmatpush1.msra.mxu0 0.0
    %662 = vmatprep.subr.mxu0 0.0
    %663 = vmatpush1.msra.mxu0 0.0
    %664 = vmatprep.subr.mxu0 0.0
    %665 = vmatpush1.msra.mxu0 0.0
    %666 = vmatprep.subr.mxu0 0.0
    %667 = vmatpush1.msra.mxu0 0.0
    %668 = vmatprep.subr.mxu0 0.0
    %669 = vmatpush1.msra.mxu0 0.0
    %670 = vmatprep.subr.mxu0 0.0
    %671 = vmatpush1.msra.mxu0 0.0
    %672 = vmatprep.mubr.f32.mxu0 0.0
    %673 = vmatmul.mubr.f32.gmra.mrb[0].mxu0 %v597
    %v674 = vpop.f32.mrb[0].mxu0
    %v675 = vadd.f32 0.0, %v674
    %v676 = vpop.f32.mrb[0].mxu0
    %677 = vmatprep.mubr.f32.mxu0 0.0
    %678 = vmatmul.mubr.f32.gmra.mrb[0].mxu0 %v600
    %v679 = vpop.f32.mrb[0].mxu0
    %v680 = vadd.f32 0.0, %v679
    %v681 = vpop.f32.mrb[0].mxu0
    %682 = vmatprep.mubr.f32.mxu0 0.0
    %683 = vmatmul.mubr.f32.gmra.mrb[0].mxu0 %v603
    %v684 = vpop.f32.mrb[0].mxu0
    %v685 = vadd.f32 0.0, %v684
    %v686 = vpop.f32.mrb[0].mxu0
    %687 = vmatprep.mubr.f32.mxu0 0.0
    %688 = vmatmul.mubr.f32.gmra.mrb[0].mxu0 %v606
    %v689 = vpop.f32.mrb[0].mxu0
    %v690 = vadd.f32 0.0, %v689
    %v691 = vpop.f32.mrb[0].mxu0
    %692 = vdwg.mxu0
    %v694 = vsel %vm201, %v570, 0
    %v697 = vsel %vm201, %v571, 0
    %v700 = vsel %vm201, %v572, 0
    %v703 = vsel %vm201, %v573, 0
    %705 = vmatprep.subr.mxu0 0.0
    %706 = vmatpush1.msra.mxu0 %v587
    %707 = vmatprep.subr.mxu0 0.0
    %708 = vmatpush1.msra.mxu0 %v588
    %709 = vmatprep.subr.mxu0 0.0
    %710 = vmatpush1.msra.mxu0 %v589
    %711 = vmatprep.subr.mxu0 0.0
    %712 = vmatpush1.msra.mxu0 %v590
    %713 = vmatprep.subr.mxu0 0.0
    %714 = vmatpush1.msra.mxu0 0.0
    %715 = vmatprep.subr.mxu0 0.0
    %716 = vmatpush1.msra.mxu0 0.0
    %717 = vmatprep.subr.mxu0 0.0
    %718 = vmatpush1.msra.mxu0 0.0
    %719 = vmatprep.subr.mxu0 0.0
    %720 = vmatpush1.msra.mxu0 0.0
    %721 = vmatprep.subr.mxu0 0.0
    %722 = vmatpush1.msra.mxu0 0.0
    %723 = vmatprep.subr.mxu0 0.0
    %724 = vmatpush1.msra.mxu0 0.0
    %725 = vmatprep.subr.mxu0 0.0
    %726 = vmatpush1.msra.mxu0 0.0
    %727 = vmatprep.subr.mxu0 0.0
    %728 = vmatpush1.msra.mxu0 0.0
    %729 = vmatprep.subr.mxu0 0.0
    %730 = vmatpush1.msra.mxu0 0.0
    %731 = vmatprep.subr.mxu0 0.0
    %732 = vmatpush1.msra.mxu0 0.0
    %733 = vmatprep.subr.mxu0 0.0
    %734 = vmatpush1.msra.mxu0 0.0
    %735 = vmatprep.subr.mxu0 0.0
    %736 = vmatpush1.msra.mxu0 0.0
    %737 = vmatprep.subr.mxu0 0.0
    %738 = vmatpush1.msra.mxu0 0.0
    %739 = vmatprep.subr.mxu0 0.0
    %740 = vmatpush1.msra.mxu0 0.0
    %741 = vmatprep.subr.mxu0 0.0
    %742 = vmatpush1.msra.mxu0 0.0
    %743 = vmatprep.subr.mxu0 0.0
    %744 = vmatpush1.msra.mxu0 0.0
    %745 = vmatprep.subr.mxu0 0.0
    %746 = vmatpush1.msra.mxu0 0.0
    %747 = vmatprep.subr.mxu0 0.0
    %748 = vmatpush1.msra.mxu0 0.0
    %749 = vmatprep.subr.mxu0 0.0
    %750 = vmatpush1.msra.mxu0 0.0
    %751 = vmatprep.subr.mxu0 0.0
    %752 = vmatpush1.msra.mxu0 0.0
    %753 = vmatprep.subr.mxu0 0.0
    %754 = vmatpush1.msra.mxu0 0.0
    %755 = vmatprep.subr.mxu0 0.0
    %756 = vmatpush1.msra.mxu0 0.0
    %757 = vmatprep.subr.mxu0 0.0
    %758 = vmatpush1.msra.mxu0 0.0
    %759 = vmatprep.subr.mxu0 0.0
    %760 = vmatpush1.msra.mxu0 0.0
    %761 = vmatprep.subr.mxu0 0.0
    %762 = vmatpush1.msra.mxu0 0.0
    %763 = vmatprep.subr.mxu0 0.0
    %764 = vmatpush1.msra.mxu0 0.0
    %765 = vmatprep.subr.mxu0 0.0
    %766 = vmatpush1.msra.mxu0 0.0
    %767 = vmatprep.subr.mxu0 0.0
    %768 = vmatpush1.msra.mxu0 0.0
    %769 = vmatprep.mubr.f32.mxu0 0.0
    %770 = vmatmul.mubr.f32.gmra.mrb[0].mxu0 %v694
    %v771 = vpop.f32.mrb[0].mxu0
    %v772 = vadd.f32 %v675, %v771
    %v773 = vpop.f32.mrb[0].mxu0
    %774 = vmatprep.mubr.f32.mxu0 0.0
    %775 = vmatmul.mubr.f32.gmra.mrb[0].mxu0 %v697
    %v776 = vpop.f32.mrb[0].mxu0
    %v777 = vadd.f32 %v680, %v776
    %v778 = vpop.f32.mrb[0].mxu0
    %779 = vmatprep.mubr.f32.mxu0 0.0
    %780 = vmatmul.mubr.f32.gmra.mrb[0].mxu0 %v700
    %v781 = vpop.f32.mrb[0].mxu0
    %v782 = vadd.f32 %v685, %v781
    %v783 = vpop.f32.mrb[0].mxu0
    %784 = vmatprep.mubr.f32.mxu0 0.0
    %785 = vmatmul.mubr.f32.gmra.mrb[0].mxu0 %v703
    %v786 = vpop.f32.mrb[0].mxu0
    %v787 = vadd.f32 %v690, %v786
    %v788 = vpop.f32.mrb[0].mxu0
    %789 = vdwg.mxu0
    %s790 = scalar_lea.vmem [#allocation2], 160
    %v791 = vld [vmem:[%s790] sm:$0xff]
    %v792 = vld [vmem:[%s790 + $0x8] sm:$0xff]
    %v793 = vld [vmem:[%s790 + $0x10] sm:$0xff]
    %v794 = vld [vmem:[%s790 + $0x18] sm:$0xff]
    %v796 = vsel %vm201, %v582, 0
    %v799 = vsel %vm201, %v583, 0
    %v802 = vsel %vm201, %v584, 0
    %v805 = vsel %vm201, %v585, 0
    %807 = vmatprep.subr.mxu0 0.0
    %808 = vmatpush1.msra.mxu0 %v791
    %809 = vmatprep.subr.mxu0 0.0
    %810 = vmatpush1.msra.mxu0 %v792
    %811 = vmatprep.subr.mxu0 0.0
    %812 = vmatpush1.msra.mxu0 %v793
    %813 = vmatprep.subr.mxu0 0.0
    %814 = vmatpush1.msra.mxu0 %v794
    %815 = vmatprep.subr.mxu0 0.0
    %816 = vmatpush1.msra.mxu0 0.0
    %817 = vmatprep.subr.mxu0 0.0
    %818 = vmatpush1.msra.mxu0 0.0
    %819 = vmatprep.subr.mxu0 0.0
    %820 = vmatpush1.msra.mxu0 0.0
    %821 = vmatprep.subr.mxu0 0.0
    %822 = vmatpush1.msra.mxu0 0.0
    %823 = vmatprep.subr.mxu0 0.0
    %824 = vmatpush1.msra.mxu0 0.0
    %825 = vmatprep.subr.mxu0 0.0
    %826 = vmatpush1.msra.mxu0 0.0
    %827 = vmatprep.subr.mxu0 0.0
    %828 = vmatpush1.msra.mxu0 0.0
    %829 = vmatprep.subr.mxu0 0.0
    %830 = vmatpush1.msra.mxu0 0.0
    %831 = vmatprep.subr.mxu0 0.0
    %832 = vmatpush1.msra.mxu0 0.0
    %833 = vmatprep.subr.mxu0 0.0
    %834 = vmatpush1.msra.mxu0 0.0
    %835 = vmatprep.subr.mxu0 0.0
    %836 = vmatpush1.msra.mxu0 0.0
    %837 = vmatprep.subr.mxu0 0.0
    %838 = vmatpush1.msra.mxu0 0.0
    %839 = vmatprep.subr.mxu0 0.0
    %840 = vmatpush1.msra.mxu0 0.0
    %841 = vmatprep.subr.mxu0 0.0
    %842 = vmatpush1.msra.mxu0 0.0
    %843 = vmatprep.subr.mxu0 0.0
    %844 = vmatpush1.msra.mxu0 0.0
    %845 = vmatprep.subr.mxu0 0.0
    %846 = vmatpush1.msra.mxu0 0.0
    %847 = vmatprep.subr.mxu0 0.0
    %848 = vmatpush1.msra.mxu0 0.0
    %849 = vmatprep.subr.mxu0 0.0
    %850 = vmatpush1.msra.mxu0 0.0
    %851 = vmatprep.subr.mxu0 0.0
    %852 = vmatpush1.msra.mxu0 0.0
    %853 = vmatprep.subr.mxu0 0.0
    %854 = vmatpush1.msra.mxu0 0.0
    %855 = vmatprep.subr.mxu0 0.0
    %856 = vmatpush1.msra.mxu0 0.0
    %857 = vmatprep.subr.mxu0 0.0
    %858 = vmatpush1.msra.mxu0 0.0
    %859 = vmatprep.subr.mxu0 0.0
    %860 = vmatpush1.msra.mxu0 0.0
    %861 = vmatprep.subr.mxu0 0.0
    %862 = vmatpush1.msra.mxu0 0.0
    %863 = vmatprep.subr.mxu0 0.0
    %864 = vmatpush1.msra.mxu0 0.0
    %865 = vmatprep.subr.mxu0 0.0
    %866 = vmatpush1.msra.mxu0 0.0
    %867 = vmatprep.subr.mxu0 0.0
    %868 = vmatpush1.msra.mxu0 0.0
    %869 = vmatprep.subr.mxu0 0.0
    %870 = vmatpush1.msra.mxu0 0.0
    %871 = vmatprep.mubr.f32.mxu0 0.0
    %872 = vmatmul.mubr.f32.gmra.mrb[0].mxu0 %v796
    %v873 = vpop.f32.mrb[0].mxu0
    %v874 = vadd.f32 0.0, %v873
    %v875 = vpop.f32.mrb[0].mxu0
    %876 = vmatprep.mubr.f32.mxu0 0.0
    %877 = vmatmul.mubr.f32.gmra.mrb[0].mxu0 %v799
    %v878 = vpop.f32.mrb[0].mxu0
    %v879 = vadd.f32 0.0, %v878
    %v880 = vpop.f32.mrb[0].mxu0
    %881 = vmatprep.mubr.f32.mxu0 0.0
    %882 = vmatmul.mubr.f32.gmra.mrb[0].mxu0 %v802
    %v883 = vpop.f32.mrb[0].mxu0
    %v884 = vadd.f32 0.0, %v883
    %v885 = vpop.f32.mrb[0].mxu0
    %886 = vmatprep.mubr.f32.mxu0 0.0
    %887 = vmatmul.mubr.f32.gmra.mrb[0].mxu0 %v805
    %v888 = vpop.f32.mrb[0].mxu0
    %v889 = vadd.f32 0.0, %v888
    %v890 = vpop.f32.mrb[0].mxu0
    %891 = vdwg.mxu0
    %v892 = vadd.f32 %v772, %v874
    %v893 = vadd.f32 %v777, %v879
    %v894 = vadd.f32 %v782, %v884
    %v895 = vadd.f32 %v787, %v889
    %v896 = vsel %vm201, %v892, 0.0
    %v897 = vsel %vm201, %v893, 0.0
    %v898 = vadd.f32 %v896, %v897
    %v899 = vsel %vm201, %v894, 0.0
    %v900 = vadd.f32 %v898, %v899
    %v901 = vsel %vm201, %v895, 0.0
    %v902 = vadd.f32 %v900, %v901
    %v903 = vrot.slane %v902, 4
    %v904 = vadd.f32 %v902, %v903
    %v905 = vrot.slane %v904, 2
    %v906 = vadd.f32 %v904, %v905
    %v907 = vrot.slane %v906, 1
    %v908 = vadd.f32 %v906, %v907
    %v909 = vmul.f32 %v908, %v515
    %v910 = vsub.f32 %v892, %v909
    %v911 = vsub.f32 %v893, %v909
    %v912 = vsub.f32 %v894, %v909
    %v913 = vsub.f32 %v895, %v909
    %v914 = vmul.f32 %v910, %v910
    %v915 = vmul.f32 %v911, %v911
    %v916 = vmul.f32 %v912, %v912
    %v917 = vmul.f32 %v913, %v913
    %v918 = vsel %vm201, %v914, 0.0
    %v919 = vsel %vm201, %v915, 0.0
    %v920 = vadd.f32 %v918, %v919
    %v921 = vsel %vm201, %v916, 0.0
    %v922 = vadd.f32 %v920, %v921
    %v923 = vsel %vm201, %v917, 0.0
    %v924 = vadd.f32 %v922, %v923
    %v925 = vrot.slane %v924, 4
    %v926 = vadd.f32 %v924, %v925
    %v927 = vrot.slane %v926, 2
    %v928 = vadd.f32 %v926, %v927
    %v929 = vrot.slane %v928, 1
    %v930 = vadd.f32 %v928, %v929
    %v931 = vmul.f32 %v930, %v515
    %v932 = vadd.f32 %v931, 1e-05
    %v933 = vrsqrt.pop %v932
    %v934 = vmul.f32 %v104, %v933
    %v935 = vlaneseq
    %v936 = vshrl.u32 %v935, 7
    %v937 = vsub.s32 2, %v936
    %v938 = vrot.slane %v934, %v937
    %v939 = vmul.f32 %v910, %v938
    %v940 = vmul.f32 %v911, %v938
    %v941 = vmul.f32 %v912, %v938
    %v942 = vmul.f32 %v913, %v938
    %v943 = vlaneseq
    %v944 = vshrl.u32 %v943, 7
    %v945 = vsub.s32 3, %v944
    %v946 = vrot.slane %v104, %v945
    %v947 = vadd.f32 %v939, %v946
    %v948 = vadd.f32 %v940, %v946
    %v949 = vadd.f32 %v941, %v946
    %v950 = vadd.f32 %v942, %v946
    %v951 = vld [vmem:[%s2] sm:$0xf]
    %v952 = vld [vmem:[%s2 + $0x4] sm:$0xf]
    %v953 = vsel %vm201, %v947, 0.0
    %v954 = vsel %vm201, %v948, 0.0
    %v955 = vadd.f32 %v953, %v954
    %v956 = vrot.slane %v955, 4
    %v957 = vadd.f32 %v955, %v956
    %v958 = vrot.slane %v957, 2
    %v959 = vadd.f32 %v957, %v958
    %v960 = vrot.slane %v959, 1
    %v961 = vadd.f32 %v959, %v960
    %v962 = vsel %vm201, %v949, 0.0
    %v963 = vsel %vm201, %v950, 0.0
    %v964 = vadd.f32 %v962, %v963
    %v965 = vrot.slane %v964, 4
    %v966 = vadd.f32 %v964, %v965
    %v967 = vrot.slane %v966, 2
    %v968 = vadd.f32 %v966, %v967
    %v969 = vrot.slane %v968, 1
    %v970 = vadd.f32 %v968, %v969
    %v971 = vrcp.pop 16.0
    %v972 = vmul.f32 %v961, %v971
    %v973 = vmul.f32 %v970, %v971
    %v974 = vmul.f32 %v972, %v951
    %v975 = vmul.f32 %v973, %v951
    %vm976 = vcmask 257024
    %v977 = vsel %vm976, %v974, 0.0
    %978 = vadd.xlane.f32.xlu0 %v977
    %v979 = vpop.xlane.xlu0 %978
    %v980 = vsel %vm976, %v975, 0.0
    %981 = vadd.xlane.f32.xlu0 %v980
    %v982 = vpop.xlane.xlu0 %981
    %v983 = vlaneseq
    %v984 = vshrl.u32 %v983, 7
    %v985 = vsub.s32 4, %v984
    %v986 = vrot.slane %v104, %v985
    %989 = vbcast.lane.b32.xlu0 %v986, 256
    %v990 = vpop.permute.xlu0 %989
    %v992 = vadd.f32 %v979, %v990
    %v993 = vadd.f32 %v982, %v990
    %v994 = vmax.f32 %v992, 0.0
    %v995 = vmax.f32 %v993, 0.0
    %997 = vset.pattern.permute.xlu0 0
    %998 = vperm.xlu0 %997, %v994
    %v999 = vpop.permute.xlu0 %998
    %1002 = vset.pattern.permute.xlu0 0
    %1003 = vperm.xlu0 %1002, %v995
    %v1004 = vpop.permute.xlu0 %1003
    %v1006 = vmul.f32 %v999, %v952
    %v1007 = vmul.f32 %v1004, %v952
    %v1008 = vsel %vm976, %v1006, 0.0
    %v1009 = vrot.slane %v1008, 4
    %v1010 = vadd.f32 %v1008, %v1009
    %v1011 = vrot.slane %v1010, 2
    %v1012 = vadd.f32 %v1010, %v1011
    %v1013 = vrot.slane %v1012, 1
    %v1014 = vadd.f32 %v1012, %v1013
    %v1015 = vsel %vm976, %v1007, 0.0
    %v1016 = vrot.slane %v1015, 4
    %v1017 = vadd.f32 %v1015, %v1016
    %v1018 = vrot.slane %v1017, 2
    %v1019 = vadd.f32 %v1017, %v1018
    %v1020 = vrot.slane %v1019, 1
    %v1021 = vadd.f32 %v1019, %v1020
    %v1022 = vlaneseq
    %v1023 = vshrl.u32 %v1022, 7
    %v1024 = vsub.s32 5, %v1023
    %v1025 = vrot.slane %v104, %v1024
    %v1026 = vadd.f32 %v1014, %v1025
    %v1027 = vadd.f32 %v1021, %v1025
    %v1028 = vxor.u32 %v1026, 2147483648
    %v1029 = vxor.u32 %v1027, 2147483648
    %v1030 = vmul.f32 %v1028, 1.442695
    %v1031 = vpow.pop %v1030
    %v1032 = vmul.f32 %v1029, 1.442695
    %v1033 = vpow.pop %v1032
    %v1034 = vadd.f32 %v1031, 1.0
    %v1035 = vadd.f32 %v1033, 1.0
    %v1036 = vrcp.pop %v1034
    %v1037 = vmul.f32 1.0, %v1036
    %v1038 = vrcp.pop %v1035
    %v1039 = vmul.f32 1.0, %v1038
    %v1040 = vlaneseq
    %v1041 = vshrl.u32 %v1040, 7
    %v1042 = vsub.s32 0, %v1041
    %v1043 = vrot.slane %v1037, %v1042
    %v1044 = vlaneseq
    %v1045 = vshrl.u32 %v1044, 7
    %v1046 = vsub.s32 0, %v1045
    %v1047 = vrot.slane %v1039, %v1046
    %v1048 = vmul.f32 %v947, %v1043
    %v1049 = vmul.f32 %v948, %v1043
    %v1050 = vmul.f32 %v949, %v1047
    %v1051 = vmul.f32 %v950, %v1047
    %v1052 = vadd.f32 %v51, %v1048
    %v1053 = vadd.f32 %v52, %v1049
    %v1054 = vadd.f32 %v88, %v1050
    %v1055 = vadd.f32 %v89, %v1051
    %v1056 = vmax.f32 %v1052, 0.0
    %v1057 = vmax.f32 %v1053, 0.0
    %v1058 = vmax.f32 %v1054, 0.0
    %v1059 = vmax.f32 %v1055, 0.0
    %1060 = vxpose.xlu0.b32.start [1/16] %v1056, 128
    %1061 = vxpose.xlu0.b32.cont [2/16] %v1057, 128
    %1062 = vxpose.xlu0.b32.cont [3/16] 0.0, 128
    %1063 = vxpose.xlu0.b32.cont [4/16] 0.0, 128
    %1064 = vxpose.xlu0.b32.cont [5/16] 0.0, 128
    %1065 = vxpose.xlu0.b32.cont [6/16] 0.0, 128
    %1066 = vxpose.xlu0.b32.cont [7/16] 0.0, 128
    %1067 = vxpose.xlu0.b32.cont [8/16] 0.0, 128
    %1068 = vxpose.xlu0.b32.cont [9/16] 0.0, 128
    %1069 = vxpose.xlu0.b32.cont [10/16] 0.0, 128
    %1070 = vxpose.xlu0.b32.cont [11/16] 0.0, 128
    %1071 = vxpose.xlu0.b32.cont [12/16] 0.0, 128
    %1072 = vxpose.xlu0.b32.cont [13/16] 0.0, 128
    %1073 = vxpose.xlu0.b32.cont [14/16] 0.0, 128
    %1074 = vxpose.xlu0.b32.cont [15/16] 0.0, 128
    %1075 = vxpose.xlu0.b32.end [16/16] 0.0, 128
    %v1076 = vpop.trf.xlu0
    %v1077 = vpop.trf.xlu0
    %v1078 = vpop.trf.xlu0
    %v1079 = vpop.trf.xlu0
    %v1080 = vpop.trf.xlu0
    %v1081 = vpop.trf.xlu0
    %v1082 = vpop.trf.xlu0
    %v1083 = vpop.trf.xlu0
    %v1084 = vpop.trf.xlu0
    %v1085 = vpop.trf.xlu0
    %v1086 = vpop.trf.xlu0
    %v1087 = vpop.trf.xlu0
    %v1088 = vpop.trf.xlu0
    %v1089 = vpop.trf.xlu0
    %v1090 = vpop.trf.xlu0
    %v1091 = vpop.trf.xlu0
    %vm1092 = vcmask 130048
    %1093 = vst.msk [vmem:[%s4] sm:$0xff] %vm1092, %v1076
    %1094 = vst.msk [vmem:[%s4 + $0x8] sm:$0xff] %vm1092, %v1077
    %1095 = vst.msk [vmem:[%s4 + $0x10] sm:$0xff] %vm1092, %v1078
    %1096 = vst.msk [vmem:[%s4 + $0x18] sm:$0xff] %vm1092, %v1079
    %1097 = vxpose.xlu0.b32.start [1/16] %v1058, 128
    %1098 = vxpose.xlu0.b32.cont [2/16] %v1059, 128
    %1099 = vxpose.xlu0.b32.cont [3/16] 0.0, 128
    %1100 = vxpose.xlu0.b32.cont [4/16] 0.0, 128
    %1101 = vxpose.xlu0.b32.cont [5/16] 0.0, 128
    %1102 = vxpose.xlu0.b32.cont [6/16] 0.0, 128
    %1103 = vxpose.xlu0.b32.cont [7/16] 0.0, 128
    %1104 = vxpose.xlu0.b32.cont [8/16] 0.0, 128
    %1105 = vxpose.xlu0.b32.cont [9/16] 0.0, 128
    %1106 = vxpose.xlu0.b32.cont [10/16] 0.0, 128
    %1107 = vxpose.xlu0.b32.cont [11/16] 0.0, 128
    %1108 = vxpose.xlu0.b32.cont [12/16] 0.0, 128
    %1109 = vxpose.xlu0.b32.cont [13/16] 0.0, 128
    %1110 = vxpose.xlu0.b32.cont [14/16] 0.0, 128
    %1111 = vxpose.xlu0.b32.cont [15/16] 0.0, 128
    %1112 = vxpose.xlu0.b32.end [16/16] 0.0, 128
    %v1113 = vpop.trf.xlu0
    %v1114 = vpop.trf.xlu0
    %v1115 = vpop.trf.xlu0
    %v1116 = vpop.trf.xlu0
    %v1117 = vpop.trf.xlu0
    %v1118 = vpop.trf.xlu0
    %v1119 = vpop.trf.xlu0
    %v1120 = vpop.trf.xlu0
    %v1121 = vpop.trf.xlu0
    %v1122 = vpop.trf.xlu0
    %v1123 = vpop.trf.xlu0
    %v1124 = vpop.trf.xlu0
    %v1125 = vpop.trf.xlu0
    %v1126 = vpop.trf.xlu0
    %v1127 = vpop.trf.xlu0
    %v1128 = vpop.trf.xlu0
    %s1129 = scalar_lea.vmem %s4, 32
    %1130 = vst.msk [vmem:[%s1129] sm:$0xff] %vm1092, %v1113
    %1131 = vst.msk [vmem:[%s1129 + $0x8] sm:$0xff] %vm1092, %v1114
    %1132 = vst.msk [vmem:[%s1129 + $0x10] sm:$0xff] %vm1092, %v1115
    %1133 = vst.msk [vmem:[%s1129 + $0x18] sm:$0xff] %vm1092, %v1116
    // Predicated region
    $region22: #{tpu_custom_call.1} parent=1 // pred_check
      _
    $region23: #{tpu_custom_call.1} parent=1 // pred_check_branch
      %1135 = sbr.rel (0) target = $region25
    $region24: #{tpu_custom_call.1} parent=1 // pred_region
      _
    $region25: #{tpu_custom_call.1} parent=1 // pred_fallthru
      _
    // Predicated region
    $region26: #{tpu_custom_call.1} parent=1 // pred_check
      _
    $region27: #{tpu_custom_call.1} parent=1 // pred_check_branch
      %1137 = sbr.rel (0) target = $region29
    $region28: #{tpu_custom_call.1} parent=1 // pred_region
      _
    $region29: #{tpu_custom_call.1} parent=1 // pred_fallthru
      _
    %1138 = vsyncpa [#allocation3], 1

</llo_original>
